<compile_context>
chip_gen: v7x
topology: tpu7x:2x2x1
jax: 0.10.0
libtpu: 0.0.40
codegen_flags: <defaults>
</compile_context>

<pallas_src>
import jax
import jax.numpy as jnp
from jax.experimental import pallas as pl
from jax.experimental.pallas import tpu as pltpu

# ----- config mirroring the PyTorch module's __init__ / cfg -----
NUM_CLASSES = 4
OVERLAP_THRESH = 0.5
NEGPOS_RATIO = 3
VARIANCE = (0.1, 0.2)
VAR0 = float(VARIANCE[0])

# Largest prior-tile (lane) extent per grid step. 16384 lanes keeps the
# double-buffered working set (~7 MiB) under v5e's 16 MiB scoped-VMEM default;
# production P≈8732 therefore runs as a single full-extent tile (grid = (B, 1)).
MAX_TILE_P = 16384


def _round_up(x, m):
    return ((x + m - 1) // m) * m


# --------------------------------------------------------------------------
# plain-JAX glue: SSD matching (match_only_four_corners semantics)
# --------------------------------------------------------------------------
def _point_form(priors):
    return jnp.concatenate(
        [priors[:, :2] - priors[:, 2:] / 2.0, priors[:, :2] + priors[:, 2:] / 2.0],
        axis=1,
    )


def _jaccard(box_a, box_b):
    max_xy = jnp.minimum(box_a[:, None, 2:], box_b[None, :, 2:])
    min_xy = jnp.maximum(box_a[:, None, :2], box_b[None, :, :2])
    wh = jnp.maximum(max_xy - min_xy, 0.0)
    inter = wh[..., 0] * wh[..., 1]
    area_a = ((box_a[:, 2] - box_a[:, 0]) * (box_a[:, 3] - box_a[:, 1]))[:, None]
    area_b = ((box_b[:, 2] - box_b[:, 0]) * (box_b[:, 3] - box_b[:, 1]))[None, :]
    return inter / (area_a + area_b - inter)


def _match_one(truths, labels, priors):
    """truths: (M, 12) = [x1,y1,x2,y2, 8 corner coords]; labels: (M,).

    Returns targets already in kernel layout:
      matched boxes (4, P), conf (P,) int32, encoded corners (8, P).
    """
    # TODO(synk): if targets are padded to a fixed M with dummy rows, a per-row
    # validity mask is needed here (dummies get force-matched like the reference).
    boxes = truths[:, :4]
    corners = truths[:, 4:12]
    m = boxes.shape[0]
    overlaps = _jaccard(boxes, _point_form(priors))          # (M, P)
    best_prior_idx = jnp.argmax(overlaps, axis=1)            # (M,)
    best_truth_overlap = jnp.max(overlaps, axis=0)           # (P,)
    best_truth_idx = jnp.argmax(overlaps, axis=0)            # (P,)
    # ensure every GT keeps its best prior
    best_truth_overlap = best_truth_overlap.at[best_prior_idx].set(2.0)
    best_truth_idx = best_truth_idx.at[best_prior_idx].set(jnp.arange(m))
    matched_boxes = boxes[best_truth_idx]                    # (P, 4) point-form GT box
    matched_corners = corners[best_truth_idx]                # (P, 8)
    conf = labels[best_truth_idx].astype(jnp.int32) + 1
    conf = jnp.where(best_truth_overlap < OVERLAP_THRESH, 0, conf)
    # encode four corners relative to prior center / size (inverse of decode)
    centers = jnp.tile(priors[:, :2], (1, 4))                # (P, 8)
    scales = jnp.tile(priors[:, 2:], (1, 4))
    enc_corners = (matched_corners - centers) / (VAR0 * scales)
    return matched_boxes.T, conf, enc_corners.T              # (4,P), (P,), (8,P)


# --------------------------------------------------------------------------
# Fused Pallas kernel:
#   * mining map  = CE with positives zeroed (padded lanes -> -1e30)
#   * per-batch partial sums: CE over positives, four-corner smooth-L1,
#     decoded border smooth-L1 (positives only)
# --------------------------------------------------------------------------
def _smooth_l1(d):
    ad = jnp.abs(d)
    return jnp.where(ad < 1.0, 0.5 * d * d, ad - 0.5)


def _make_fused_kernel(num_classes, p_valid, tile_p):
    inv_var0 = 1.0 / VAR0

    def kernel(conf_ref, conf_t_ref, fcp_ref, fct_ref, gt_ref, pri_ref,
               mine_ref, posce_ref, fc_ref, bd_ref):
        conf = conf_ref[...]                 # (1, C, TP) f32
        conf_t = conf_t_ref[...]             # (1, 1, TP) i32

        # ---- per-prior cross entropy, unrolled over the small static class axis
        # (no iota materialization, no sublane XLU reduce) ----
        rows = [conf[:, c:c + 1, :] for c in range(num_classes)]
        rowmax = rows[0]
        for r in rows[1:]:
            rowmax = jnp.maximum(rowmax, r)
        esum = jnp.zeros_like(rowmax)
        gathered = jnp.zeros_like(rowmax)
        for c, r in enumerate(rows):
            esum = esum + jnp.exp(r - rowmax)
            gathered = gathered + jnp.where(conf_t == c, r, 0.0)
        ce = jnp.log(esum) + rowmax - gathered               # (1, 1, TP)

        pos = conf_t > 0                                      # (1, 1, TP) bool
        posf = pos.astype(jnp.float32)

        # ---- mining map: CE with positives zeroed; padded lanes rank last ----
        lane = (jax.lax.broadcasted_iota(jnp.int32, ce.shape, 2)
                + pl.program_id(1) * tile_p)
        mine = jnp.where(pos, 0.0, ce)
        mine_ref[...] = jnp.where(lane < p_valid, mine, -1e30)

        # ---- per-batch partial sums, accumulated over prior tiles ----
        @pl.when(pl.program_id(1) == 0)
        def _():
            posce_ref[...] = jnp.zeros_like(posce_ref)
            fc_ref[...] = jnp.zeros_like(fc_ref)
            bd_ref[...] = jnp.zeros_like(bd_ref)

        posce_ref[...] += jnp.broadcast_to(jnp.sum(ce * posf), posce_ref.shape)

        # four-corner regression smooth-L1 (positives only)
        fcp = fcp_ref[...]                   # (1, 8, TP)
        fct = fct_ref[...]                   # (1, 8, TP)
        fc_sum = jnp.sum(_smooth_l1(fcp - fct) * posf)
        fc_ref[...] += jnp.broadcast_to(fc_sum, fc_ref.shape)

        # decode_four_corners + border smooth-L1 (positives only)
        pri = pri_ref[...]                   # (4, TP): cx, cy, w, h
        cx, cy = pri[0:1, :], pri[1:2, :]
        sw, sh = VAR0 * pri[2:3, :], VAR0 * pri[3:4, :]
        gt = gt_ref[...]                     # (1, 4, TP): x1, y1, x2, y2
        d0 = cx + fcp[:, 0, :] * sw
        d1 = cy + fcp[:, 1, :] * sh
        d2 = cx + fcp[:, 2, :] * sw
        d3 = cy + fcp[:, 3, :] * sh
        d4 = cx + fcp[:, 4, :] * sw
        d5 = cy + fcp[:, 5, :] * sh
        d6 = cx + fcp[:, 6, :] * sw
        d7 = cy + fcp[:, 7, :] * sh
        # Reference divides BOTH smooth_l1 arguments by variance[0], i.e. the
        # factor sits inside the (nonlinear) smooth-L1 argument — kept identical.
        border = (_smooth_l1((jnp.minimum(d0, d6) - gt[:, 0, :]) * inv_var0)
                  + _smooth_l1((jnp.minimum(d1, d3) - gt[:, 1, :]) * inv_var0)
                  + _smooth_l1((jnp.maximum(d2, d4) - gt[:, 2, :]) * inv_var0)
                  + _smooth_l1((jnp.maximum(d5, d7) - gt[:, 3, :]) * inv_var0))
        bd_sum = jnp.sum(border * posf[:, 0, :])
        bd_ref[...] += jnp.broadcast_to(bd_sum, bd_ref.shape)

    return kernel


def _fused_loss_call(conf_bcp, conf_t3, fcp, fct, gt, priors_t, p_valid, tile_p):
    bsz, c, p_pad = conf_bcp.shape
    n_pt = p_pad // tile_p
    kernel = _make_fused_kernel(c, p_valid, tile_p)
    part_spec = pl.BlockSpec((1, 1, 128), lambda b, t: (b, 0, 0))
    return pl.pallas_call(
        kernel,
        out_shape=(
            jax.ShapeDtypeStruct((bsz, 1, p_pad), jnp.float32),   # mining map
            jax.ShapeDtypeStruct((bsz, 1, 128), jnp.float32),     # sum CE over positives
            jax.ShapeDtypeStruct((bsz, 1, 128), jnp.float32),     # four-corner sum
            jax.ShapeDtypeStruct((bsz, 1, 128), jnp.float32),     # border sum
        ),
        grid=(bsz, n_pt),
        in_specs=[
            pl.BlockSpec((1, c, tile_p), lambda b, t: (b, 0, t)),
            pl.BlockSpec((1, 1, tile_p), lambda b, t: (b, 0, t)),
            pl.BlockSpec((1, 8, tile_p), lambda b, t: (b, 0, t)),
            pl.BlockSpec((1, 8, tile_p), lambda b, t: (b, 0, t)),
            pl.BlockSpec((1, 4, tile_p), lambda b, t: (b, 0, t)),
            pl.BlockSpec((4, tile_p), lambda b, t: (0, t)),       # priors: index is
        ],                                                        # constant when n_pt==1
        out_specs=(
            pl.BlockSpec((1, 1, tile_p), lambda b, t: (b, 0, t)),
            part_spec, part_spec, part_spec,
        ),
        compiler_params=pltpu.CompilerParams(
            dimension_semantics=("parallel", "arbitrary")),
    )(conf_bcp, conf_t3, fcp, fct, gt, priors_t)


# --------------------------------------------------------------------------
# full forward
# --------------------------------------------------------------------------
@jax.jit
def multibox_loss_forward(conf_data, priors, four_corners_data, targets):
    """predictions = (conf_data (B,P,C), priors (P,4), four_corners (B,P,8));
    targets (B, M, 13) = [x1,y1,x2,y2, 8 corner coords, label]."""
    b, p, _ = conf_data.shape
    priors = priors[:p, :]

    truths = targets[:, :, :12]
    labels = targets[:, :, 12]
    # targets come out of matching already in kernel layout (B, K, P)
    gt_t, conf_t, fct_t = jax.vmap(lambda t, l: _match_one(t, l, priors))(truths, labels)

    # ---- tiling: priors on the lane axis; full-extent tile whenever it fits ----
    p128 = _round_up(p, 128)
    if p128 <= MAX_TILE_P:
        tile_p, n_pt = p128, 1
    else:
        n_pt = -(-p128 // MAX_TILE_P)
        tile_p = _round_up(-(-p128 // n_pt), 128)
    p_pad = tile_p * n_pt

    def pad_last(x):
        return jnp.pad(x, [(0, 0)] * (x.ndim - 1) + [(0, p_pad - p)])

    # TODO(synk): the (0,2,1) transposes of the network outputs could be folded
    # into the pallas_call input DMA via allow_input_fusion to save one HBM
    # round-trip per tensor; matching targets are already produced transposed.
    conf_bcp = pad_last(jnp.transpose(conf_data, (0, 2, 1)))        # (B, C, Pp)
    fcp = pad_last(jnp.transpose(four_corners_data, (0, 2, 1)))     # (B, 8, Pp)
    fct = pad_last(fct_t)                                           # (B, 8, Pp)
    gt = pad_last(gt_t)                                             # (B, 4, Pp)
    priors_t = pad_last(jnp.transpose(priors, (1, 0)))              # (4, Pp)
    conf_t3 = pad_last(conf_t[:, None, :])                          # (B, 1, Pp) i32

    # ---- fused kernel: mining map + per-batch partial sums ----
    mine_map, posce_part, fc_part, bd_part = _fused_loss_call(
        conf_bcp, conf_t3, fcp, fct, gt, priors_t, p, tile_p)

    # ---- hard negative mining (rank-based; exact reference double-sort semantics,
    #      second sort done as argsort(order) == inverse permutation, no scatter) ----
    mine = mine_map[:, 0, :]                                        # (B, Pp)
    order = jnp.argsort(-mine, axis=1)                              # descending CE
    ranks = jnp.argsort(order, axis=1)                              # rank of each prior
    num_pos = jnp.sum((conf_t > 0).astype(jnp.int32), axis=1, keepdims=True)  # (B,1)
    num_neg = jnp.minimum(NEGPOS_RATIO * num_pos, p - 1)
    neg = ranks < num_neg                                           # (B, Pp)

    # CE over pos ∪ mined-neg  ==  (CE over pos) + (mining-map CE over mined-neg)
    ce_sum = jnp.sum(posce_part[:, 0, 0]) + jnp.sum(mine * neg.astype(jnp.float32))
    fc_sum = jnp.sum(fc_part[:, 0, 0])
    bd_sum = jnp.sum(bd_part[:, 0, 0])

    # guard against zero positives (reference would produce Inf/NaN here)
    n = jnp.maximum(jnp.sum(num_pos).astype(jnp.float32), 1.0)
    # TODO(synk): PyTorch casts the final losses to double; TPU keeps float32.
    loss_c = ce_sum / n
    loss_four_corners = fc_sum / n
    loss_border = 16.0 * bd_sum / n
    return loss_c, loss_four_corners, loss_border


# --------------------------------------------------------------------------
if __name__ == "__main__":
    key = jax.random.PRNGKey(0)
    B, P, M, C = 2, 128, 4, NUM_CLASSES
    ks = jax.random.split(key, 8)

    # priors: cx, cy, w, h
    cxcy = jax.random.uniform(ks[0], (P, 2), minval=0.2, maxval=0.8)
    wh = jax.random.uniform(ks[1], (P, 2), minval=0.1, maxval=0.3)
    priors = jnp.concatenate([cxcy, wh], axis=1).astype(jnp.float32)

    conf_data = jax.random.normal(ks[2], (B, P, C), dtype=jnp.float32)
    four_corners_data = 0.1 * jax.random.normal(ks[3], (B, P, 8), dtype=jnp.float32)

    # synthetic ground truth: boxes in point form + 4 corner points (tl,tr,br,bl)
    gcxcy = jax.random.uniform(ks[4], (B, M, 2), minval=0.3, maxval=0.7)
    gwh = jax.random.uniform(ks[5], (B, M, 2), minval=0.1, maxval=0.3)
    x1y1 = gcxcy - gwh / 2.0
    x2y2 = gcxcy + gwh / 2.0
    boxes = jnp.concatenate([x1y1, x2y2], axis=-1)  # (B, M, 4)
    corners = jnp.stack(
        [x1y1[..., 0], x1y1[..., 1],   # top-left
         x2y2[..., 0], x1y1[..., 1],   # top-right
         x2y2[..., 0], x2y2[..., 1],   # bottom-right
         x1y1[..., 0], x2y2[..., 1]],  # bottom-left
        axis=-1)  # (B, M, 8)
    labels = jax.random.randint(ks[6], (B, M), 0, C - 1).astype(jnp.float32)
    targets = jnp.concatenate([boxes, corners, labels[..., None]], axis=-1)  # (B, M, 13)

    loss_c, loss_four_corners, loss_border = multibox_loss_forward(
        conf_data, priors, four_corners_data, targets)
    jax.block_until_ready((loss_c, loss_four_corners, loss_border))
    print("KERNEL_OK")
</pallas_src>

<mosaic_0001>
module attributes {stable_mosaic.version = 11 : i64} {
  func.func @kernel(%arg0: i32, %arg1: i32, %arg2: memref<1x4x128xf32, #tpu.memory_space<vmem>>, %arg3: memref<1x1x128xi32, #tpu.memory_space<vmem>>, %arg4: memref<1x8x128xf32, #tpu.memory_space<vmem>>, %arg5: memref<1x8x128xf32, #tpu.memory_space<vmem>>, %arg6: memref<1x4x128xf32, #tpu.memory_space<vmem>>, %arg7: memref<4x128xf32, #tpu.memory_space<vmem>>, %arg8: memref<1x1x128xf32, #tpu.memory_space<vmem>>, %arg9: memref<1x1x128xf32, #tpu.memory_space<vmem>>, %arg10: memref<1x1x128xf32, #tpu.memory_space<vmem>>, %arg11: memref<1x1x128xf32, #tpu.memory_space<vmem>>) attributes {dimension_semantics = [#tpu.dimension_semantics<parallel>, #tpu.dimension_semantics<arbitrary>], iteration_bounds = array<i64: 2, 1>, scalar_prefetch = 0 : i64, scratch_operands = 0 : i64, tpu.core_type = #tpu.core_type<tc>, window_params = [{transform_indices = @transform_0, window_bounds = array<i64: 1, 4, 128>}, {transform_indices = @transform_1, window_bounds = array<i64: 1, 1, 128>}, {transform_indices = @transform_2, window_bounds = array<i64: 1, 8, 128>}, {transform_indices = @transform_3, window_bounds = array<i64: 1, 8, 128>}, {transform_indices = @transform_4, window_bounds = array<i64: 1, 4, 128>}, {transform_indices = @transform_5, window_bounds = array<i64: 4, 128>}, {transform_indices = @transform_6, window_bounds = array<i64: 1, 1, 128>}, {transform_indices = @transform_7, window_bounds = array<i64: 1, 1, 128>}, {transform_indices = @transform_8, window_bounds = array<i64: 1, 1, 128>}, {transform_indices = @transform_9, window_bounds = array<i64: 1, 1, 128>}]} {
    %c0 = arith.constant 0 : index
    %c0_0 = arith.constant 0 : index
    %c0_1 = arith.constant 0 : index
    %0 = vector.load %arg2[%c0, %c0_0, %c0_1] : memref<1x4x128xf32, #tpu.memory_space<vmem>>, vector<1x4x128xf32>
    %c0_2 = arith.constant 0 : index
    %c0_3 = arith.constant 0 : index
    %c0_4 = arith.constant 0 : index
    %1 = vector.load %arg3[%c0_2, %c0_3, %c0_4] : memref<1x1x128xi32, #tpu.memory_space<vmem>>, vector<1x1x128xi32>
    %2 = vector.extract_strided_slice %0 {offsets = [0, 0, 0], sizes = [1, 1, 128], strides = [1, 1, 1]} : vector<1x4x128xf32> to vector<1x1x128xf32>
    %3 = vector.extract_strided_slice %0 {offsets = [0, 1, 0], sizes = [1, 1, 128], strides = [1, 1, 1]} : vector<1x4x128xf32> to vector<1x1x128xf32>
    %4 = vector.extract_strided_slice %0 {offsets = [0, 2, 0], sizes = [1, 1, 128], strides = [1, 1, 1]} : vector<1x4x128xf32> to vector<1x1x128xf32>
    %5 = vector.extract_strided_slice %0 {offsets = [0, 3, 0], sizes = [1, 1, 128], strides = [1, 1, 1]} : vector<1x4x128xf32> to vector<1x1x128xf32>
    %6 = arith.maximumf %2, %3 : vector<1x1x128xf32>
    %7 = arith.maximumf %6, %4 : vector<1x1x128xf32>
    %8 = arith.maximumf %7, %5 : vector<1x1x128xf32>
    %cst = arith.constant 0.000000e+00 : f32
    %9 = vector.broadcast %cst : f32 to vector<1x1x128xf32>
    %cst_5 = arith.constant 0.000000e+00 : f32
    %10 = vector.broadcast %cst_5 : f32 to vector<1x1x128xf32>
    %11 = arith.subf %2, %8 : vector<1x1x128xf32>
    %12 = math.exp %11 : vector<1x1x128xf32>
    %13 = arith.addf %9, %12 : vector<1x1x128xf32>
    %c0_i32 = arith.constant 0 : i32
    %14 = vector.broadcast %c0_i32 : i32 to vector<1x1x128xi32>
    %15 = arith.cmpi eq, %1, %14 : vector<1x1x128xi32>
    %cst_6 = arith.constant 0.000000e+00 : f32
    %16 = vector.broadcast %cst_6 : f32 to vector<1x1x128xf32>
    %17 = arith.select %15, %2, %16 : vector<1x1x128xi1>, vector<1x1x128xf32>
    %18 = arith.addf %10, %17 : vector<1x1x128xf32>
    %19 = arith.subf %3, %8 : vector<1x1x128xf32>
    %20 = math.exp %19 : vector<1x1x128xf32>
    %21 = arith.addf %13, %20 : vector<1x1x128xf32>
    %c1_i32 = arith.constant 1 : i32
    %22 = vector.broadcast %c1_i32 : i32 to vector<1x1x128xi32>
    %23 = arith.cmpi eq, %1, %22 : vector<1x1x128xi32>
    %cst_7 = arith.constant 0.000000e+00 : f32
    %24 = vector.broadcast %cst_7 : f32 to vector<1x1x128xf32>
    %25 = arith.select %23, %3, %24 : vector<1x1x128xi1>, vector<1x1x128xf32>
    %26 = arith.addf %18, %25 : vector<1x1x128xf32>
    %27 = arith.subf %4, %8 : vector<1x1x128xf32>
    %28 = math.exp %27 : vector<1x1x128xf32>
    %29 = arith.addf %21, %28 : vector<1x1x128xf32>
    %c2_i32 = arith.constant 2 : i32
    %30 = vector.broadcast %c2_i32 : i32 to vector<1x1x128xi32>
    %31 = arith.cmpi eq, %1, %30 : vector<1x1x128xi32>
    %cst_8 = arith.constant 0.000000e+00 : f32
    %32 = vector.broadcast %cst_8 : f32 to vector<1x1x128xf32>
    %33 = arith.select %31, %4, %32 : vector<1x1x128xi1>, vector<1x1x128xf32>
    %34 = arith.addf %26, %33 : vector<1x1x128xf32>
    %35 = arith.subf %5, %8 : vector<1x1x128xf32>
    %36 = math.exp %35 : vector<1x1x128xf32>
    %37 = arith.addf %29, %36 : vector<1x1x128xf32>
    %c3_i32 = arith.constant 3 : i32
    %38 = vector.broadcast %c3_i32 : i32 to vector<1x1x128xi32>
    %39 = arith.cmpi eq, %1, %38 : vector<1x1x128xi32>
    %cst_9 = arith.constant 0.000000e+00 : f32
    %40 = vector.broadcast %cst_9 : f32 to vector<1x1x128xf32>
    %41 = arith.select %39, %5, %40 : vector<1x1x128xi1>, vector<1x1x128xf32>
    %42 = arith.addf %34, %41 : vector<1x1x128xf32>
    %43 = math.log %37 : vector<1x1x128xf32>
    %44 = arith.addf %43, %8 : vector<1x1x128xf32>
    %45 = arith.subf %44, %42 : vector<1x1x128xf32>
    %c0_i32_10 = arith.constant 0 : i32
    %46 = vector.broadcast %c0_i32_10 : i32 to vector<1x1x128xi32>
    %47 = arith.cmpi sgt, %1, %46 : vector<1x1x128xi32>
    %48 = arith.extui %47 : vector<1x1x128xi1> to vector<1x1x128xi32>
    %49 = arith.sitofp %48 : vector<1x1x128xi32> to vector<1x1x128xf32>
    %50 = tpu.iota {dimensions = array<i32: 2>} : vector<1x1x128xi32>
    %c128_i32 = arith.constant 128 : i32
    %51 = arith.muli %arg1, %c128_i32 : i32
    %52 = vector.broadcast %51 : i32 to vector<1x1x128xi32>
    %53 = arith.addi %50, %52 : vector<1x1x128xi32>
    %cst_11 = arith.constant 0.000000e+00 : f32
    %54 = vector.broadcast %cst_11 : f32 to vector<1x1x128xf32>
    %55 = arith.select %47, %54, %45 : vector<1x1x128xi1>, vector<1x1x128xf32>
    %c128_i32_12 = arith.constant 128 : i32
    %56 = vector.broadcast %c128_i32_12 : i32 to vector<1x1x128xi32>
    %57 = arith.cmpi slt, %53, %56 : vector<1x1x128xi32>
    %cst_13 = arith.constant -1.000000e+30 : f32
    %58 = vector.broadcast %cst_13 : f32 to vector<1x1x128xf32>
    %59 = arith.select %57, %55, %58 : vector<1x1x128xi1>, vector<1x1x128xf32>
    %c0_14 = arith.constant 0 : index
    %c0_15 = arith.constant 0 : index
    %c0_16 = arith.constant 0 : index
    %60 = vector.load %arg8[%c0_14, %c0_15, %c0_16] : memref<1x1x128xf32, #tpu.memory_space<vmem>>, vector<1x1x128xf32>
    tpu.vector_store %arg8[%c0_14, %c0_15, %c0_16], %59 {strides = array<i32>} : memref<1x1x128xf32, #tpu.memory_space<vmem>>, vector<1x1x128xf32>,
    %c0_i32_17 = arith.constant 0 : i32
    %61 = arith.cmpi eq, %arg1, %c0_i32_17 : i32
    %62 = arith.extui %61 : i1 to i32
    %c0_i32_18 = arith.constant 0 : i32
    %63 = arith.cmpi ne, %62, %c0_i32_18 : i32
    scf.if %63 {
      %cst_72 = arith.constant 0.000000e+00 : f32
      %210 = vector.broadcast %cst_72 : f32 to vector<1x1x128xf32>
      %c0_73 = arith.constant 0 : index
      %c0_74 = arith.constant 0 : index
      %c0_75 = arith.constant 0 : index
      %211 = vector.load %arg9[%c0_73, %c0_74, %c0_75] : memref<1x1x128xf32, #tpu.memory_space<vmem>>, vector<1x1x128xf32>
      tpu.vector_store %arg9[%c0_73, %c0_74, %c0_75], %210 {strides = array<i32>} : memref<1x1x128xf32, #tpu.memory_space<vmem>>, vector<1x1x128xf32>,
      %cst_76 = arith.constant 0.000000e+00 : f32
      %212 = vector.broadcast %cst_76 : f32 to vector<1x1x128xf32>
      %c0_77 = arith.constant 0 : index
      %c0_78 = arith.constant 0 : index
      %c0_79 = arith.constant 0 : index
      %213 = vector.load %arg10[%c0_77, %c0_78, %c0_79] : memref<1x1x128xf32, #tpu.memory_space<vmem>>, vector<1x1x128xf32>
      tpu.vector_store %arg10[%c0_77, %c0_78, %c0_79], %212 {strides = array<i32>} : memref<1x1x128xf32, #tpu.memory_space<vmem>>, vector<1x1x128xf32>,
      %cst_80 = arith.constant 0.000000e+00 : f32
      %214 = vector.broadcast %cst_80 : f32 to vector<1x1x128xf32>
      %c0_81 = arith.constant 0 : index
      %c0_82 = arith.constant 0 : index
      %c0_83 = arith.constant 0 : index
      %215 = vector.load %arg11[%c0_81, %c0_82, %c0_83] : memref<1x1x128xf32, #tpu.memory_space<vmem>>, vector<1x1x128xf32>
      tpu.vector_store %arg11[%c0_81, %c0_82, %c0_83], %214 {strides = array<i32>} : memref<1x1x128xf32, #tpu.memory_space<vmem>>, vector<1x1x128xf32>,
    } else {
    }
    %c0_19 = arith.constant 0 : index
    %c0_20 = arith.constant 0 : index
    %c0_21 = arith.constant 0 : index
    %64 = vector.load %arg9[%c0_19, %c0_20, %c0_21] : memref<1x1x128xf32, #tpu.memory_space<vmem>>, vector<1x1x128xf32>
    %65 = arith.mulf %45, %49 : vector<1x1x128xf32>
    %66 = vector.shape_cast %65 : vector<1x1x128xf32> to vector<1x1x1x128xf32>
    %cst_22 = arith.constant dense<0.000000e+00> : vector<1xf32>
    %67 = vector.multi_reduction <add>, %66, %cst_22 [1, 2, 3] : vector<1x1x1x128xf32> to vector<1xf32>
    %68 = vector.shape_cast %67 : vector<1xf32> to vector<1x1x1x1xf32>
    %69 = vector.extract %68[0, 0, 0, 0] : f32 from vector<1x1x1x1xf32>
    %70 = vector.broadcast %69 : f32 to vector<1x1x128xf32>
    %71 = arith.addf %64, %70 : vector<1x1x128xf32>
    %c0_23 = arith.constant 0 : index
    %c0_24 = arith.constant 0 : index
    %c0_25 = arith.constant 0 : index
    %72 = vector.load %arg9[%c0_23, %c0_24, %c0_25] : memref<1x1x128xf32, #tpu.memory_space<vmem>>, vector<1x1x128xf32>
    tpu.vector_store %arg9[%c0_23, %c0_24, %c0_25], %71 {strides = array<i32>} : memref<1x1x128xf32, #tpu.memory_space<vmem>>, vector<1x1x128xf32>,
    %c0_26 = arith.constant 0 : index
    %c0_27 = arith.constant 0 : index
    %c0_28 = arith.constant 0 : index
    %73 = vector.load %arg4[%c0_26, %c0_27, %c0_28] : memref<1x8x128xf32, #tpu.memory_space<vmem>>, vector<1x8x128xf32>
    %c0_29 = arith.constant 0 : index
    %c0_30 = arith.constant 0 : index
    %c0_31 = arith.constant 0 : index
    %74 = vector.load %arg5[%c0_29, %c0_30, %c0_31] : memref<1x8x128xf32, #tpu.memory_space<vmem>>, vector<1x8x128xf32>
    %75 = arith.subf %73, %74 : vector<1x8x128xf32>
    %76 = math.absf %75 : vector<1x8x128xf32>
    %cst_32 = arith.constant 1.000000e+00 : f32
    %77 = vector.broadcast %cst_32 : f32 to vector<1x8x128xf32>
    %78 = arith.cmpf olt, %76, %77 : vector<1x8x128xf32>
    %cst_33 = arith.constant 5.000000e-01 : f32
    %79 = vector.broadcast %cst_33 : f32 to vector<1x8x128xf32>
    %80 = arith.mulf %79, %75 : vector<1x8x128xf32>
    %81 = arith.mulf %80, %75 : vector<1x8x128xf32>
    %cst_34 = arith.constant 5.000000e-01 : f32
    %82 = vector.broadcast %cst_34 : f32 to vector<1x8x128xf32>
    %83 = arith.subf %76, %82 : vector<1x8x128xf32>
    %84 = arith.select %78, %81, %83 : vector<1x8x128xi1>, vector<1x8x128xf32>
    %85 = vector.broadcast %49 : vector<1x1x128xf32> to vector<1x8x128xf32>
    %86 = arith.mulf %84, %85 : vector<1x8x128xf32>
    %87 = vector.shape_cast %86 : vector<1x8x128xf32> to vector<1x1x8x128xf32>
    %cst_35 = arith.constant dense<0.000000e+00> : vector<1xf32>
    %88 = vector.multi_reduction <add>, %87, %cst_35 [1, 2, 3] : vector<1x1x8x128xf32> to vector<1xf32>
    %89 = vector.shape_cast %88 : vector<1xf32> to vector<1x1x1x1xf32>
    %90 = vector.extract %89[0, 0, 0, 0] : f32 from vector<1x1x1x1xf32>
    %c0_36 = arith.constant 0 : index
    %c0_37 = arith.constant 0 : index
    %c0_38 = arith.constant 0 : index
    %91 = vector.load %arg10[%c0_36, %c0_37, %c0_38] : memref<1x1x128xf32, #tpu.memory_space<vmem>>, vector<1x1x128xf32>
    %92 = vector.broadcast %90 : f32 to vector<1x1x128xf32>
    %93 = arith.addf %91, %92 : vector<1x1x128xf32>
    %c0_39 = arith.constant 0 : index
    %c0_40 = arith.constant 0 : index
    %c0_41 = arith.constant 0 : index
    %94 = vector.load %arg10[%c0_39, %c0_40, %c0_41] : memref<1x1x128xf32, #tpu.memory_space<vmem>>, vector<1x1x128xf32>
    tpu.vector_store %arg10[%c0_39, %c0_40, %c0_41], %93 {strides = array<i32>} : memref<1x1x128xf32, #tpu.memory_space<vmem>>, vector<1x1x128xf32>,
    %c0_42 = arith.constant 0 : index
    %c0_43 = arith.constant 0 : index
    %95 = vector.load %arg7[%c0_42, %c0_43] : memref<4x128xf32, #tpu.memory_space<vmem>>, vector<4x128xf32>
    %96 = vector.extract_strided_slice %95 {offsets = [0, 0], sizes = [1, 128], strides = [1, 1]} : vector<4x128xf32> to vector<1x128xf32>
    %97 = vector.extract_strided_slice %95 {offsets = [1, 0], sizes = [1, 128], strides = [1, 1]} : vector<4x128xf32> to vector<1x128xf32>
    %98 = vector.extract_strided_slice %95 {offsets = [2, 0], sizes = [1, 128], strides = [1, 1]} : vector<4x128xf32> to vector<1x128xf32>
    %cst_44 = arith.constant 1.000000e-01 : f32
    %99 = vector.broadcast %cst_44 : f32 to vector<1x128xf32>
    %100 = arith.mulf %99, %98 : vector<1x128xf32>
    %101 = vector.extract_strided_slice %95 {offsets = [3, 0], sizes = [1, 128], strides = [1, 1]} : vector<4x128xf32> to vector<1x128xf32>
    %cst_45 = arith.constant 1.000000e-01 : f32
    %102 = vector.broadcast %cst_45 : f32 to vector<1x128xf32>
    %103 = arith.mulf %102, %101 : vector<1x128xf32>
    %c0_46 = arith.constant 0 : index
    %c0_47 = arith.constant 0 : index
    %c0_48 = arith.constant 0 : index
    %104 = vector.load %arg6[%c0_46, %c0_47, %c0_48] : memref<1x4x128xf32, #tpu.memory_space<vmem>>, vector<1x4x128xf32>
    %105 = vector.extract_strided_slice %73 {offsets = [0, 0, 0], sizes = [1, 1, 128], strides = [1, 1, 1]} : vector<1x8x128xf32> to vector<1x1x128xf32>
    %106 = vector.shape_cast %105 : vector<1x1x128xf32> to vector<1x128xf32>
    %107 = arith.mulf %106, %100 : vector<1x128xf32>
    %108 = arith.addf %96, %107 : vector<1x128xf32>
    %109 = vector.extract_strided_slice %73 {offsets = [0, 1, 0], sizes = [1, 1, 128], strides = [1, 1, 1]} : vector<1x8x128xf32> to vector<1x1x128xf32>
    %110 = vector.shape_cast %109 : vector<1x1x128xf32> to vector<1x128xf32>
    %111 = arith.mulf %110, %103 : vector<1x128xf32>
    %112 = arith.addf %97, %111 : vector<1x128xf32>
    %113 = vector.extract_strided_slice %73 {offsets = [0, 2, 0], sizes = [1, 1, 128], strides = [1, 1, 1]} : vector<1x8x128xf32> to vector<1x1x128xf32>
    %114 = vector.shape_cast %113 : vector<1x1x128xf32> to vector<1x128xf32>
    %115 = arith.mulf %114, %100 : vector<1x128xf32>
    %116 = arith.addf %96, %115 : vector<1x128xf32>
    %117 = vector.extract_strided_slice %73 {offsets = [0, 3, 0], sizes = [1, 1, 128], strides = [1, 1, 1]} : vector<1x8x128xf32> to vector<1x1x128xf32>
    %118 = vector.shape_cast %117 : vector<1x1x128xf32> to vector<1x128xf32>
    %119 = arith.mulf %118, %103 : vector<1x128xf32>
    %120 = arith.addf %97, %119 : vector<1x128xf32>
    %121 = vector.extract_strided_slice %73 {offsets = [0, 4, 0], sizes = [1, 1, 128], strides = [1, 1, 1]} : vector<1x8x128xf32> to vector<1x1x128xf32>
    %122 = vector.shape_cast %121 : vector<1x1x128xf32> to vector<1x128xf32>
    %123 = arith.mulf %122, %100 : vector<1x128xf32>
    %124 = arith.addf %96, %123 : vector<1x128xf32>
    %125 = vector.extract_strided_slice %73 {offsets = [0, 5, 0], sizes = [1, 1, 128], strides = [1, 1, 1]} : vector<1x8x128xf32> to vector<1x1x128xf32>
    %126 = vector.shape_cast %125 : vector<1x1x128xf32> to vector<1x128xf32>
    %127 = arith.mulf %126, %103 : vector<1x128xf32>
    %128 = arith.addf %97, %127 : vector<1x128xf32>
    %129 = vector.extract_strided_slice %73 {offsets = [0, 6, 0], sizes = [1, 1, 128], strides = [1, 1, 1]} : vector<1x8x128xf32> to vector<1x1x128xf32>
    %130 = vector.shape_cast %129 : vector<1x1x128xf32> to vector<1x128xf32>
    %131 = arith.mulf %130, %100 : vector<1x128xf32>
    %132 = arith.addf %96, %131 : vector<1x128xf32>
    %133 = vector.extract_strided_slice %73 {offsets = [0, 7, 0], sizes = [1, 1, 128], strides = [1, 1, 1]} : vector<1x8x128xf32> to vector<1x1x128xf32>
    %134 = vector.shape_cast %133 : vector<1x1x128xf32> to vector<1x128xf32>
    %135 = arith.mulf %134, %103 : vector<1x128xf32>
    %136 = arith.addf %97, %135 : vector<1x128xf32>
    %137 = arith.minimumf %108, %132 : vector<1x128xf32>
    %138 = vector.extract_strided_slice %104 {offsets = [0, 0, 0], sizes = [1, 1, 128], strides = [1, 1, 1]} : vector<1x4x128xf32> to vector<1x1x128xf32>
    %139 = vector.shape_cast %138 : vector<1x1x128xf32> to vector<1x128xf32>
    %140 = arith.subf %137, %139 : vector<1x128xf32>
    %cst_49 = arith.constant 1.000000e+01 : f32
    %141 = vector.broadcast %cst_49 : f32 to vector<1x128xf32>
    %142 = arith.mulf %140, %141 : vector<1x128xf32>
    %143 = math.absf %142 : vector<1x128xf32>
    %cst_50 = arith.constant 1.000000e+00 : f32
    %144 = vector.broadcast %cst_50 : f32 to vector<1x128xf32>
    %145 = arith.cmpf olt, %143, %144 : vector<1x128xf32>
    %cst_51 = arith.constant 5.000000e-01 : f32
    %146 = vector.broadcast %cst_51 : f32 to vector<1x128xf32>
    %147 = arith.mulf %146, %142 : vector<1x128xf32>
    %148 = arith.mulf %147, %142 : vector<1x128xf32>
    %cst_52 = arith.constant 5.000000e-01 : f32
    %149 = vector.broadcast %cst_52 : f32 to vector<1x128xf32>
    %150 = arith.subf %143, %149 : vector<1x128xf32>
    %151 = arith.select %145, %148, %150 : vector<1x128xi1>, vector<1x128xf32>
    %152 = arith.minimumf %112, %120 : vector<1x128xf32>
    %153 = vector.extract_strided_slice %104 {offsets = [0, 1, 0], sizes = [1, 1, 128], strides = [1, 1, 1]} : vector<1x4x128xf32> to vector<1x1x128xf32>
    %154 = vector.shape_cast %153 : vector<1x1x128xf32> to vector<1x128xf32>
    %155 = arith.subf %152, %154 : vector<1x128xf32>
    %cst_53 = arith.constant 1.000000e+01 : f32
    %156 = vector.broadcast %cst_53 : f32 to vector<1x128xf32>
    %157 = arith.mulf %155, %156 : vector<1x128xf32>
    %158 = math.absf %157 : vector<1x128xf32>
    %cst_54 = arith.constant 1.000000e+00 : f32
    %159 = vector.broadcast %cst_54 : f32 to vector<1x128xf32>
    %160 = arith.cmpf olt, %158, %159 : vector<1x128xf32>
    %cst_55 = arith.constant 5.000000e-01 : f32
    %161 = vector.broadcast %cst_55 : f32 to vector<1x128xf32>
    %162 = arith.mulf %161, %157 : vector<1x128xf32>
    %163 = arith.mulf %162, %157 : vector<1x128xf32>
    %cst_56 = arith.constant 5.000000e-01 : f32
    %164 = vector.broadcast %cst_56 : f32 to vector<1x128xf32>
    %165 = arith.subf %158, %164 : vector<1x128xf32>
    %166 = arith.select %160, %163, %165 : vector<1x128xi1>, vector<1x128xf32>
    %167 = arith.addf %151, %166 : vector<1x128xf32>
    %168 = arith.maximumf %116, %124 : vector<1x128xf32>
    %169 = vector.extract_strided_slice %104 {offsets = [0, 2, 0], sizes = [1, 1, 128], strides = [1, 1, 1]} : vector<1x4x128xf32> to vector<1x1x128xf32>
    %170 = vector.shape_cast %169 : vector<1x1x128xf32> to vector<1x128xf32>
    %171 = arith.subf %168, %170 : vector<1x128xf32>
    %cst_57 = arith.constant 1.000000e+01 : f32
    %172 = vector.broadcast %cst_57 : f32 to vector<1x128xf32>
    %173 = arith.mulf %171, %172 : vector<1x128xf32>
    %174 = math.absf %173 : vector<1x128xf32>
    %cst_58 = arith.constant 1.000000e+00 : f32
    %175 = vector.broadcast %cst_58 : f32 to vector<1x128xf32>
    %176 = arith.cmpf olt, %174, %175 : vector<1x128xf32>
    %cst_59 = arith.constant 5.000000e-01 : f32
    %177 = vector.broadcast %cst_59 : f32 to vector<1x128xf32>
    %178 = arith.mulf %177, %173 : vector<1x128xf32>
    %179 = arith.mulf %178, %173 : vector<1x128xf32>
    %cst_60 = arith.constant 5.000000e-01 : f32
    %180 = vector.broadcast %cst_60 : f32 to vector<1x128xf32>
    %181 = arith.subf %174, %180 : vector<1x128xf32>
    %182 = arith.select %176, %179, %181 : vector<1x128xi1>, vector<1x128xf32>
    %183 = arith.addf %167, %182 : vector<1x128xf32>
    %184 = arith.maximumf %128, %136 : vector<1x128xf32>
    %185 = vector.extract_strided_slice %104 {offsets = [0, 3, 0], sizes = [1, 1, 128], strides = [1, 1, 1]} : vector<1x4x128xf32> to vector<1x1x128xf32>
    %186 = vector.shape_cast %185 : vector<1x1x128xf32> to vector<1x128xf32>
    %187 = arith.subf %184, %186 : vector<1x128xf32>
    %cst_61 = arith.constant 1.000000e+01 : f32
    %188 = vector.broadcast %cst_61 : f32 to vector<1x128xf32>
    %189 = arith.mulf %187, %188 : vector<1x128xf32>
    %190 = math.absf %189 : vector<1x128xf32>
    %cst_62 = arith.constant 1.000000e+00 : f32
    %191 = vector.broadcast %cst_62 : f32 to vector<1x128xf32>
    %192 = arith.cmpf olt, %190, %191 : vector<1x128xf32>
    %cst_63 = arith.constant 5.000000e-01 : f32
    %193 = vector.broadcast %cst_63 : f32 to vector<1x128xf32>
    %194 = arith.mulf %193, %189 : vector<1x128xf32>
    %195 = arith.mulf %194, %189 : vector<1x128xf32>
    %cst_64 = arith.constant 5.000000e-01 : f32
    %196 = vector.broadcast %cst_64 : f32 to vector<1x128xf32>
    %197 = arith.subf %190, %196 : vector<1x128xf32>
    %198 = arith.select %192, %195, %197 : vector<1x128xi1>, vector<1x128xf32>
    %199 = arith.addf %183, %198 : vector<1x128xf32>
    %200 = vector.shape_cast %49 : vector<1x1x128xf32> to vector<1x128xf32>
    %201 = arith.mulf %199, %200 : vector<1x128xf32>
    %202 = vector.shape_cast %201 : vector<1x128xf32> to vector<1x1x128xf32>
    %cst_65 = arith.constant dense<0.000000e+00> : vector<1xf32>
    %203 = vector.multi_reduction <add>, %202, %cst_65 [1, 2] : vector<1x1x128xf32> to vector<1xf32>
    %204 = vector.shape_cast %203 : vector<1xf32> to vector<1x1x1xf32>
    %205 = vector.extract %204[0, 0, 0] : f32 from vector<1x1x1xf32>
    %c0_66 = arith.constant 0 : index
    %c0_67 = arith.constant 0 : index
    %c0_68 = arith.constant 0 : index
    %206 = vector.load %arg11[%c0_66, %c0_67, %c0_68] : memref<1x1x128xf32, #tpu.memory_space<vmem>>, vector<1x1x128xf32>
    %207 = vector.broadcast %205 : f32 to vector<1x1x128xf32>
    %208 = arith.addf %206, %207 : vector<1x1x128xf32>
    %c0_69 = arith.constant 0 : index
    %c0_70 = arith.constant 0 : index
    %c0_71 = arith.constant 0 : index
    %209 = vector.load %arg11[%c0_69, %c0_70, %c0_71] : memref<1x1x128xf32, #tpu.memory_space<vmem>>, vector<1x1x128xf32>
    tpu.vector_store %arg11[%c0_69, %c0_70, %c0_71], %208 {strides = array<i32>} : memref<1x1x128xf32, #tpu.memory_space<vmem>>, vector<1x1x128xf32>,
    return
  }
  func.func @transform_0(%arg0: i32, %arg1: i32) -> (i32, i32, i32) {
    %c0_i32 = arith.constant 0 : i32
    %c0_i32_0 = arith.constant 0 : i32
    return %arg0, %c0_i32, %arg1 : i32, i32, i32
  }
  func.func @transform_1(%arg0: i32, %arg1: i32) -> (i32, i32, i32) {
    %c0_i32 = arith.constant 0 : i32
    %c0_i32_0 = arith.constant 0 : i32
    return %arg0, %c0_i32, %arg1 : i32, i32, i32
  }
  func.func @transform_2(%arg0: i32, %arg1: i32) -> (i32, i32, i32) {
    %c0_i32 = arith.constant 0 : i32
    %c0_i32_0 = arith.constant 0 : i32
    return %arg0, %c0_i32, %arg1 : i32, i32, i32
  }
  func.func @transform_3(%arg0: i32, %arg1: i32) -> (i32, i32, i32) {
    %c0_i32 = arith.constant 0 : i32
    %c0_i32_0 = arith.constant 0 : i32
    return %arg0, %c0_i32, %arg1 : i32, i32, i32
  }
  func.func @transform_4(%arg0: i32, %arg1: i32) -> (i32, i32, i32) {
    %c0_i32 = arith.constant 0 : i32
    %c0_i32_0 = arith.constant 0 : i32
    return %arg0, %c0_i32, %arg1 : i32, i32, i32
  }
  func.func @transform_5(%arg0: i32, %arg1: i32) -> (i32, i32) {
    %c0_i32 = arith.constant 0 : i32
    %c0_i32_0 = arith.constant 0 : i32
    return %c0_i32, %arg1 : i32, i32
  }
  func.func @transform_6(%arg0: i32, %arg1: i32) -> (i32, i32, i32) {
    %c0_i32 = arith.constant 0 : i32
    %c0_i32_0 = arith.constant 0 : i32
    return %arg0, %c0_i32, %arg1 : i32, i32, i32
  }
  func.func @transform_7(%arg0: i32, %arg1: i32) -> (i32, i32, i32) {
    %c0_i32 = arith.constant 0 : i32
    %c0_i32_0 = arith.constant 0 : i32
    %c0_i32_1 = arith.constant 0 : i32
    return %arg0, %c0_i32, %c0_i32_0 : i32, i32, i32
  }
  func.func @transform_8(%arg0: i32, %arg1: i32) -> (i32, i32, i32) {
    %c0_i32 = arith.constant 0 : i32
    %c0_i32_0 = arith.constant 0 : i32
    %c0_i32_1 = arith.constant 0 : i32
    return %arg0, %c0_i32, %c0_i32_0 : i32, i32, i32
  }
  func.func @transform_9(%arg0: i32, %arg1: i32) -> (i32, i32, i32) {
    %c0_i32 = arith.constant 0 : i32
    %c0_i32_0 = arith.constant 0 : i32
    %c0_i32_1 = arith.constant 0 : i32
    return %arg0, %c0_i32, %c0_i32_0 : i32, i32, i32
  }
}

</mosaic_0001>

<llo_original>
// kernel: neg.1
$region0: #{neg.1}
  #allocation0 [shape = 's32[1]{0}', space=sflag, size = 0x4, scoped, tag = 'scoped memory for neg.1']
  %s0 = inlined_call_operand.vmem [shape: f32[2,128], index: 0, kind: input, shape index: {}]
  %s1 = inlined_call_operand.vmem [shape: f32[2,128], index: 1, kind: output, shape index: {}]
  %v2 = vld [vmem:[%s0] sm:$0x3]
  %3 = xla_tuple %v2
  %4 = xla_tuple %3
  %v5 = vxor.u32 %v2, 2147483648
  %6 = xla_tuple %v5
  %7 = vst [vmem:[%s1] sm:$0x3] %v5

// kernel: multibox_loss_forward.1
$region0: #{multibox_loss_forward.1}
  #allocation0 [shape = 'u32[]', space=smem, size = 0x4, offset = 0x4, fixed_abs, tag = 'smem constant byte address 0x4 - core index']
  #allocation1 [shape = 'u32[144,128]{1,0:T(1,128)}', space=vmem, size = 0x12000, scoped, tag = 'internal scratch']
  %s0 = inlined_call_operand.vmem [shape: f32[2,4,128], index: 0, kind: input, shape index: {}]
  %s1 = inlined_call_operand.vmem [shape: s32[2,1,128], index: 1, kind: input, shape index: {}]
  %s2 = inlined_call_operand.vmem [shape: f32[2,8,128], index: 2, kind: input, shape index: {}]
  %s3 = inlined_call_operand.vmem [shape: f32[2,8,128], index: 3, kind: input, shape index: {}]
  %s4 = inlined_call_operand.vmem [shape: f32[2,4,128], index: 4, kind: input, shape index: {}]
  %s5 = inlined_call_operand.vmem [shape: f32[4,128], index: 5, kind: input, shape index: {}]
  %s6 = inlined_call_operand.vmem [shape: f32[2,1,128], index: 6, kind: output, shape index: {0}]
  %s7 = inlined_call_operand.vmem [shape: f32[2,1,128], index: 7, kind: output, shape index: {1}]
  %s8 = inlined_call_operand.vmem [shape: f32[2,1,128], index: 8, kind: output, shape index: {2}]
  %s9 = inlined_call_operand.vmem [shape: f32[2,1,128], index: 9, kind: output, shape index: {3}]
  %10 = xla_tuple %s6, %s7, %s8, %s9
  %s11 = sld [smem:[#allocation0]]
  $region85: #{multibox_loss_forward.1} parent=0
    _
  %s13 = ssub.s32 1, %s11
  %s14 = scalar_select 0, %s13, %s11
  loop: start=0, step=1, limit=4
  $region2: #{multibox_loss_forward.1} parent=0 // loop_pre_header
    _
  $region3: #{multibox_loss_forward.1} parent=0 // loop_header
    %s16 = sphi 0, %s20
    %p17 = scmp.ge.s32.totalorder %s16, 4
    %s23 = sphi 0, %s35
    %s24 = sphi 0, %s31
    %s25 = sphi 0, %s23
    %s26 = sphi 0, %s24
    %s27 = sphi 0, %s25
    %s28 = sphi 0, %s26
    %s40 = sphi 0, %s42
    %s43 = sphi 0, %s40
    %s44 = sphi 0, %s43
    %s60 = sphi 0, %s44
    %s68 = sphi 0, %s70
    %s71 = sphi 0, %s68
    %s72 = sphi 0, %s71
    %s88 = sphi 0, %s72
    %s96 = sphi 0, %s98
    %s99 = sphi 0, %s96
    %s100 = sphi 0, %s99
    %s116 = sphi 0, %s100
    %s124 = sphi 0, %s126
    %s127 = sphi 0, %s124
    %s128 = sphi 0, %s127
    %s144 = sphi 0, %s128
    %s152 = sphi 0, %s154
    %s155 = sphi 0, %s152
    %s156 = sphi 0, %s155
    %s172 = sphi 0, %s156
    %s178 = sphi 0, %s180
    %s181 = sphi 0, %s178
    %s182 = sphi 0, %s181
    %s198 = sphi 0, %s182
    %s206 = sphi 0, %s208
    %s209 = sphi 0, %s206
    %s210 = sphi 0, %s209
    %s226 = sphi 0, %s210
    %s232 = sphi 0, %s234
    %s235 = sphi 0, %s232
    %s236 = sphi 0, %s235
    %s252 = sphi 0, %s236
    %s258 = sphi 0, %s260
    %s261 = sphi 0, %s258
    %s262 = sphi 0, %s261
    %s278 = sphi 0, %s262
    %s284 = sphi 0, %s286
    %s287 = sphi 0, %s284
    %s288 = sphi 0, %s287
    %s304 = sphi 0, %s288
  $region4: #{multibox_loss_forward.1} parent=0 // loop_header_branch
    %19 = sbr.rel (%p17) target = $region8
  $region5: #{multibox_loss_forward.1} parent=0 // loop_body
    %s21 = ssub.s32 %s16, 1
    %s22 = ssub.s32 %s16, 2
    %s29 = sadd.s32 1, %s24
    %p30 = scmp.ge.s32.totalorder %s29, 1
    %s31 = scalar_select %p30, 0, %s29
    %s32 = sadd.s32 1, %s23
    %s33 = scalar_select %p30, %s32, %s23
    %p34 = scmp.ge.s32.totalorder %s33, 2
    %s35 = scalar_select %p34, 0, %s33
    %s36 = ssub.s32 %s23, %s35
    %s37 = ssub.s32 %s24, %s31
    %s38 = sor.u32 %s36, %s37
    %p39 = scmp.eq.s32.totalorder %s38, 0
    %s41 = sadd.s32 %s40, 1
    %s42 = scalar_select %p39, %s40, %s41
    %p45 = pneg %p39
    %p46 = scmp.eq.s32.totalorder %s16, 1
    %p47 = por %p45, %p46
    %p48 = scmp.ne.s32.totalorder %s40, %s43
    %p49 = scmp.eq.s32.totalorder %s16, 0
    %p50 = por %p48, %p49
    %p51 = scmp.ne.s32.totalorder %s40, %s43
    %p52 = scmp.eq.s32.totalorder %s21, 1
    %p53 = por %p51, %p52
    %p54 = scmp.ne.s32.totalorder %s43, %s44
    %p55 = scmp.eq.s32.totalorder %s21, 0
    %p56 = por %p54, %p55
    %p57 = scmp.ne.s32.totalorder %s43, %s44
    %p58 = scmp.eq.s32.totalorder %s22, 1
    %p59 = por %p57, %p58
    %p61 = scmp.ne.s32.totalorder %s44, %s60
    %p62 = scmp.eq.s32.totalorder %s22, 0
    %p63 = por %p61, %p62
    %s64 = ssub.s32 %s23, %s35
    %s65 = ssub.s32 %s24, %s31
    %s66 = sor.u32 %s64, %s65
    %p67 = scmp.eq.s32.totalorder %s66, 0
    %s69 = sadd.s32 %s68, 1
    %s70 = scalar_select %p67, %s68, %s69
    %p73 = pneg %p67
    %p74 = scmp.eq.s32.totalorder %s16, 1
    %p75 = por %p73, %p74
    %p76 = scmp.ne.s32.totalorder %s68, %s71
    %p77 = scmp.eq.s32.totalorder %s16, 0
    %p78 = por %p76, %p77
    %p79 = scmp.ne.s32.totalorder %s68, %s71
    %p80 = scmp.eq.s32.totalorder %s21, 1
    %p81 = por %p79, %p80
    %p82 = scmp.ne.s32.totalorder %s71, %s72
    %p83 = scmp.eq.s32.totalorder %s21, 0
    %p84 = por %p82, %p83
    %p85 = scmp.ne.s32.totalorder %s71, %s72
    %p86 = scmp.eq.s32.totalorder %s22, 1
    %p87 = por %p85, %p86
    %p89 = scmp.ne.s32.totalorder %s72, %s88
    %p90 = scmp.eq.s32.totalorder %s22, 0
    %p91 = por %p89, %p90
    %s92 = ssub.s32 %s23, %s35
    %s93 = ssub.s32 %s24, %s31
    %s94 = sor.u32 %s92, %s93
    %p95 = scmp.eq.s32.totalorder %s94, 0
    %s97 = sadd.s32 %s96, 1
    %s98 = scalar_select %p95, %s96, %s97
    %p101 = pneg %p95
    %p102 = scmp.eq.s32.totalorder %s16, 1
    %p103 = por %p101, %p102
    %p104 = scmp.ne.s32.totalorder %s96, %s99
    %p105 = scmp.eq.s32.totalorder %s16, 0
    %p106 = por %p104, %p105
    %p107 = scmp.ne.s32.totalorder %s96, %s99
    %p108 = scmp.eq.s32.totalorder %s21, 1
    %p109 = por %p107, %p108
    %p110 = scmp.ne.s32.totalorder %s99, %s100
    %p111 = scmp.eq.s32.totalorder %s21, 0
    %p112 = por %p110, %p111
    %p113 = scmp.ne.s32.totalorder %s99, %s100
    %p114 = scmp.eq.s32.totalorder %s22, 1
    %p115 = por %p113, %p114
    %p117 = scmp.ne.s32.totalorder %s100, %s116
    %p118 = scmp.eq.s32.totalorder %s22, 0
    %p119 = por %p117, %p118
    %s120 = ssub.s32 %s23, %s35
    %s121 = ssub.s32 %s24, %s31
    %s122 = sor.u32 %s120, %s121
    %p123 = scmp.eq.s32.totalorder %s122, 0
    %s125 = sadd.s32 %s124, 1
    %s126 = scalar_select %p123, %s124, %s125
    %p129 = pneg %p123
    %p130 = scmp.eq.s32.totalorder %s16, 1
    %p131 = por %p129, %p130
    %p132 = scmp.ne.s32.totalorder %s124, %s127
    %p133 = scmp.eq.s32.totalorder %s16, 0
    %p134 = por %p132, %p133
    %p135 = scmp.ne.s32.totalorder %s124, %s127
    %p136 = scmp.eq.s32.totalorder %s21, 1
    %p137 = por %p135, %p136
    %p138 = scmp.ne.s32.totalorder %s127, %s128
    %p139 = scmp.eq.s32.totalorder %s21, 0
    %p140 = por %p138, %p139
    %p141 = scmp.ne.s32.totalorder %s127, %s128
    %p142 = scmp.eq.s32.totalorder %s22, 1
    %p143 = por %p141, %p142
    %p145 = scmp.ne.s32.totalorder %s128, %s144
    %p146 = scmp.eq.s32.totalorder %s22, 0
    %p147 = por %p145, %p146
    %s148 = ssub.s32 %s23, %s35
    %s149 = ssub.s32 %s24, %s31
    %s150 = sor.u32 %s148, %s149
    %p151 = scmp.eq.s32.totalorder %s150, 0
    %s153 = sadd.s32 %s152, 1
    %s154 = scalar_select %p151, %s152, %s153
    %p157 = pneg %p151
    %p158 = scmp.eq.s32.totalorder %s16, 1
    %p159 = por %p157, %p158
    %p160 = scmp.ne.s32.totalorder %s152, %s155
    %p161 = scmp.eq.s32.totalorder %s16, 0
    %p162 = por %p160, %p161
    %p163 = scmp.ne.s32.totalorder %s152, %s155
    %p164 = scmp.eq.s32.totalorder %s21, 1
    %p165 = por %p163, %p164
    %p166 = scmp.ne.s32.totalorder %s155, %s156
    %p167 = scmp.eq.s32.totalorder %s21, 0
    %p168 = por %p166, %p167
    %p169 = scmp.ne.s32.totalorder %s155, %s156
    %p170 = scmp.eq.s32.totalorder %s22, 1
    %p171 = por %p169, %p170
    %p173 = scmp.ne.s32.totalorder %s156, %s172
    %p174 = scmp.eq.s32.totalorder %s22, 0
    %p175 = por %p173, %p174
    %s176 = ssub.s32 %s24, %s31
    %p177 = scmp.eq.s32.totalorder %s176, 0
    %s179 = sadd.s32 %s178, 1
    %s180 = scalar_select %p177, %s178, %s179
    %p183 = pneg %p177
    %p184 = scmp.eq.s32.totalorder %s16, 1
    %p185 = por %p183, %p184
    %p186 = scmp.ne.s32.totalorder %s178, %s181
    %p187 = scmp.eq.s32.totalorder %s16, 0
    %p188 = por %p186, %p187
    %p189 = scmp.ne.s32.totalorder %s178, %s181
    %p190 = scmp.eq.s32.totalorder %s21, 1
    %p191 = por %p189, %p190
    %p192 = scmp.ne.s32.totalorder %s181, %s182
    %p193 = scmp.eq.s32.totalorder %s21, 0
    %p194 = por %p192, %p193
    %p195 = scmp.ne.s32.totalorder %s181, %s182
    %p196 = scmp.eq.s32.totalorder %s22, 1
    %p197 = por %p195, %p196
    %p199 = scmp.ne.s32.totalorder %s182, %s198
    %p200 = scmp.eq.s32.totalorder %s22, 0
    %p201 = por %p199, %p200
    %s202 = ssub.s32 %s23, %s35
    %s203 = ssub.s32 %s24, %s31
    %s204 = sor.u32 %s202, %s203
    %p205 = scmp.eq.s32.totalorder %s204, 0
    %s207 = sadd.s32 %s206, 1
    %s208 = scalar_select %p205, %s206, %s207
    %p211 = pneg %p205
    %p212 = scmp.eq.s32.totalorder %s16, 1
    %p213 = por %p211, %p212
    %p214 = scmp.ne.s32.totalorder %s206, %s209
    %p215 = scmp.eq.s32.totalorder %s16, 0
    %p216 = por %p214, %p215
    %p217 = scmp.ne.s32.totalorder %s206, %s209
    %p218 = scmp.eq.s32.totalorder %s21, 1
    %p219 = por %p217, %p218
    %p220 = scmp.ne.s32.totalorder %s209, %s210
    %p221 = scmp.eq.s32.totalorder %s21, 0
    %p222 = por %p220, %p221
    %p223 = scmp.ne.s32.totalorder %s209, %s210
    %p224 = scmp.eq.s32.totalorder %s22, 1
    %p225 = por %p223, %p224
    %p227 = scmp.ne.s32.totalorder %s210, %s226
    %p228 = scmp.eq.s32.totalorder %s22, 0
    %p229 = por %p227, %p228
    %s230 = ssub.s32 %s23, %s35
    %p231 = scmp.eq.s32.totalorder %s230, 0
    %s233 = sadd.s32 %s232, 1
    %s234 = scalar_select %p231, %s232, %s233
    %p237 = pneg %p231
    %p238 = scmp.eq.s32.totalorder %s16, 1
    %p239 = por %p237, %p238
    %p240 = scmp.ne.s32.totalorder %s232, %s235
    %p241 = scmp.eq.s32.totalorder %s16, 0
    %p242 = por %p240, %p241
    %p243 = scmp.ne.s32.totalorder %s232, %s235
    %p244 = scmp.eq.s32.totalorder %s21, 1
    %p245 = por %p243, %p244
    %p246 = scmp.ne.s32.totalorder %s235, %s236
    %p247 = scmp.eq.s32.totalorder %s21, 0
    %p248 = por %p246, %p247
    %p249 = scmp.ne.s32.totalorder %s235, %s236
    %p250 = scmp.eq.s32.totalorder %s22, 1
    %p251 = por %p249, %p250
    %p253 = scmp.ne.s32.totalorder %s236, %s252
    %p254 = scmp.eq.s32.totalorder %s22, 0
    %p255 = por %p253, %p254
    %s256 = ssub.s32 %s23, %s35
    %p257 = scmp.eq.s32.totalorder %s256, 0
    %s259 = sadd.s32 %s258, 1
    %s260 = scalar_select %p257, %s258, %s259
    %p263 = pneg %p257
    %p264 = scmp.eq.s32.totalorder %s16, 1
    %p265 = por %p263, %p264
    %p266 = scmp.ne.s32.totalorder %s258, %s261
    %p267 = scmp.eq.s32.totalorder %s16, 0
    %p268 = por %p266, %p267
    %p269 = scmp.ne.s32.totalorder %s258, %s261
    %p270 = scmp.eq.s32.totalorder %s21, 1
    %p271 = por %p269, %p270
    %p272 = scmp.ne.s32.totalorder %s261, %s262
    %p273 = scmp.eq.s32.totalorder %s21, 0
    %p274 = por %p272, %p273
    %p275 = scmp.ne.s32.totalorder %s261, %s262
    %p276 = scmp.eq.s32.totalorder %s22, 1
    %p277 = por %p275, %p276
    %p279 = scmp.ne.s32.totalorder %s262, %s278
    %p280 = scmp.eq.s32.totalorder %s22, 0
    %p281 = por %p279, %p280
    %s282 = ssub.s32 %s23, %s35
    %p283 = scmp.eq.s32.totalorder %s282, 0
    %s285 = sadd.s32 %s284, 1
    %s286 = scalar_select %p283, %s284, %s285
    %p289 = pneg %p283
    %p290 = scmp.eq.s32.totalorder %s16, 1
    %p291 = por %p289, %p290
    %p292 = scmp.ne.s32.totalorder %s284, %s287
    %p293 = scmp.eq.s32.totalorder %s16, 0
    %p294 = por %p292, %p293
    %p295 = scmp.ne.s32.totalorder %s284, %s287
    %p296 = scmp.eq.s32.totalorder %s21, 1
    %p297 = por %p295, %p296
    %p298 = scmp.ne.s32.totalorder %s287, %s288
    %p299 = scmp.eq.s32.totalorder %s21, 0
    %p300 = por %p298, %p299
    %p301 = scmp.ne.s32.totalorder %s287, %s288
    %p302 = scmp.eq.s32.totalorder %s22, 1
    %p303 = por %p301, %p302
    %p305 = scmp.ne.s32.totalorder %s288, %s304
    %p306 = scmp.eq.s32.totalorder %s22, 0
    %p307 = por %p305, %p306
    %p308 = scmp.le.s32.totalorder 1, %s16
    %p309 = scmp.lt.s32.totalorder %s16, 3
    %p310 = pnand %p308, %p309
    %p311 = pneg %p310
    // Predicated region
    $region9: #{multibox_loss_forward.1} parent=5 // pred_check
      _
    $region10: #{multibox_loss_forward.1} parent=5 // pred_check_branch
      %313 = sbr.rel (%p310) target = $region12
    $region11: #{multibox_loss_forward.1} parent=5 // pred_region
      %s314 = ssub.s32 %s16, 1
      // Predicated region
      $region13: #{multibox_loss_forward.1} parent=11 // pred_check
        %p315 = pneg %p194
      $region14: #{multibox_loss_forward.1} parent=11 // pred_check_branch
        %317 = sbr.rel (%p315) target = $region16
      $region15: #{multibox_loss_forward.1} parent=11 // pred_region
        %p318 = scmp.lt.s32.totalorder %s26, 0
        %s319 = scalar_select %p318, %s26, 0
        %s320 = smul.addr %s319, 4
        %s321 = scalar_lea.vmem %s5, %s320
      $region16: #{multibox_loss_forward.1} parent=11 // pred_fallthru
        _
    $region12: #{multibox_loss_forward.1} parent=5 // pred_fallthru
      _
    %p322 = scmp.lt.s32.totalorder %s16, 2
    // Predicated region
    $region17: #{multibox_loss_forward.1} parent=5 // pred_check
      %p323 = pneg %p322
    $region18: #{multibox_loss_forward.1} parent=5 // pred_check_branch
      %325 = sbr.rel (%p323) target = $region20
    $region19: #{multibox_loss_forward.1} parent=5 // pred_region
      // Predicated region
      $region21: #{multibox_loss_forward.1} parent=19 // pred_check
        %p326 = pneg %p50
      $region22: #{multibox_loss_forward.1} parent=19 // pred_check_branch
        %328 = sbr.rel (%p326) target = $region24
      $region23: #{multibox_loss_forward.1} parent=19 // pred_region
        %p329 = scmp.lt.s32.totalorder %s23, 1
        %s330 = scalar_select %p329, %s23, 1
        %p331 = scmp.lt.s32.totalorder %s24, 0
        %s332 = scalar_select %p331, %s24, 0
        %s333 = sadd.s32 %s332, %s330
        %s334 = smul.addr %s333, 4
        %s335 = scalar_lea.vmem %s0, %s334
      $region24: #{multibox_loss_forward.1} parent=19 // pred_fallthru
        _
      // Predicated region
      $region25: #{multibox_loss_forward.1} parent=19 // pred_check
        %p336 = pneg %p78
      $region26: #{multibox_loss_forward.1} parent=19 // pred_check_branch
        %338 = sbr.rel (%p336) target = $region28
      $region27: #{multibox_loss_forward.1} parent=19 // pred_region
        %p339 = scmp.lt.s32.totalorder %s23, 1
        %s340 = scalar_select %p339, %s23, 1
        %p341 = scmp.lt.s32.totalorder %s24, 0
        %s342 = scalar_select %p341, %s24, 0
        %s343 = sadd.s32 %s342, %s340
        %s344 = scalar_lea.vmem %s1, %s343
      $region28: #{multibox_loss_forward.1} parent=19 // pred_fallthru
        _
      // Predicated region
      $region29: #{multibox_loss_forward.1} parent=19 // pred_check
        %p345 = pneg %p106
      $region30: #{multibox_loss_forward.1} parent=19 // pred_check_branch
        %347 = sbr.rel (%p345) target = $region32
      $region31: #{multibox_loss_forward.1} parent=19 // pred_region
        %p348 = scmp.lt.s32.totalorder %s23, 1
        %s349 = scalar_select %p348, %s23, 1
        %p350 = scmp.lt.s32.totalorder %s24, 0
        %s351 = scalar_select %p350, %s24, 0
        %s352 = sadd.s32 %s351, %s349
        %s353 = smul.addr %s352, 8
        %s354 = scalar_lea.vmem %s2, %s353
      $region32: #{multibox_loss_forward.1} parent=19 // pred_fallthru
        _
      // Predicated region
      $region33: #{multibox_loss_forward.1} parent=19 // pred_check
        %p355 = pneg %p134
      $region34: #{multibox_loss_forward.1} parent=19 // pred_check_branch
        %357 = sbr.rel (%p355) target = $region36
      $region35: #{multibox_loss_forward.1} parent=19 // pred_region
        %p358 = scmp.lt.s32.totalorder %s23, 1
        %s359 = scalar_select %p358, %s23, 1
        %p360 = scmp.lt.s32.totalorder %s24, 0
        %s361 = scalar_select %p360, %s24, 0
        %s362 = sadd.s32 %s361, %s359
        %s363 = smul.addr %s362, 8
        %s364 = scalar_lea.vmem %s3, %s363
      $region36: #{multibox_loss_forward.1} parent=19 // pred_fallthru
        _
      // Predicated region
      $region37: #{multibox_loss_forward.1} parent=19 // pred_check
        %p365 = pneg %p162
      $region38: #{multibox_loss_forward.1} parent=19 // pred_check_branch
        %367 = sbr.rel (%p365) target = $region40
      $region39: #{multibox_loss_forward.1} parent=19 // pred_region
        %p368 = scmp.lt.s32.totalorder %s23, 1
        %s369 = scalar_select %p368, %s23, 1
        %p370 = scmp.lt.s32.totalorder %s24, 0
        %s371 = scalar_select %p370, %s24, 0
        %s372 = sadd.s32 %s371, %s369
        %s373 = smul.addr %s372, 4
        %s374 = scalar_lea.vmem %s4, %s373
      $region40: #{multibox_loss_forward.1} parent=19 // pred_fallthru
        _
    $region20: #{multibox_loss_forward.1} parent=5 // pred_fallthru
      _
    %p375 = scmp.le.s32.totalorder 1, %s16
    %p376 = scmp.lt.s32.totalorder %s16, 3
    %p377 = pnand %p375, %p376
    %p378 = pneg %p377
    // Predicated region
    $region41: #{multibox_loss_forward.1} parent=5 // pred_check
      _
    $region42: #{multibox_loss_forward.1} parent=5 // pred_check_branch
      %380 = sbr.rel (%p377) target = $region44
    $region43: #{multibox_loss_forward.1} parent=5 // pred_region
      %s381 = ssub.s32 %s16, 1
      %p382 = scmp.lt.s32.totalorder %s25, 1
      %s383 = scalar_select %p382, %s25, 1
      %p384 = scmp.lt.s32.totalorder %s26, 0
      %s385 = scalar_select %p384, %s26, 0
      %s386 = sadd.s32 %s385, %s383
      %s387 = smul.addr %s386, 4
      %s388 = scalar_lea.vmem %s0, %s387
      %p389 = pneg %p56
      %p390 = pneg %p53
      %p391 = scmp.lt.s32.totalorder %s25, 1
      %s392 = scalar_select %p391, %s25, 1
      %p393 = scmp.lt.s32.totalorder %s26, 0
      %s394 = scalar_select %p393, %s26, 0
      %s395 = sadd.s32 %s394, %s392
      %s396 = scalar_lea.vmem %s1, %s395
      %p397 = pneg %p84
      %p398 = pneg %p81
      %p399 = scmp.lt.s32.totalorder %s25, 1
      %s400 = scalar_select %p399, %s25, 1
      %p401 = scmp.lt.s32.totalorder %s26, 0
      %s402 = scalar_select %p401, %s26, 0
      %s403 = sadd.s32 %s402, %s400
      %s404 = smul.addr %s403, 8
      %s405 = scalar_lea.vmem %s2, %s404
      %p406 = pneg %p112
      %p407 = pneg %p109
      %p408 = scmp.lt.s32.totalorder %s25, 1
      %s409 = scalar_select %p408, %s25, 1
      %p410 = scmp.lt.s32.totalorder %s26, 0
      %s411 = scalar_select %p410, %s26, 0
      %s412 = sadd.s32 %s411, %s409
      %s413 = smul.addr %s412, 8
      %s414 = scalar_lea.vmem %s3, %s413
      %p415 = pneg %p140
      %p416 = pneg %p137
      %p417 = scmp.lt.s32.totalorder %s25, 1
      %s418 = scalar_select %p417, %s25, 1
      %p419 = scmp.lt.s32.totalorder %s26, 0
      %s420 = scalar_select %p419, %s26, 0
      %s421 = sadd.s32 %s420, %s418
      %s422 = smul.addr %s421, 4
      %s423 = scalar_lea.vmem %s4, %s422
      %p424 = pneg %p168
      %p425 = pneg %p165
      %p426 = scmp.lt.s32.totalorder %s26, 0
      %s427 = scalar_select %p426, %s26, 0
      %s428 = smul.addr %s427, 4
      %s429 = scalar_lea.vmem %s5, %s428
      %p430 = pneg %p194
      %p431 = pneg %p191
      %p432 = pneg %p222
      %p433 = pneg %p219
      %p434 = scmp.lt.s32.totalorder %s25, 1
      %s435 = scalar_select %p434, %s25, 1
      %p436 = scmp.lt.s32.totalorder %s26, 0
      %s437 = scalar_select %p436, %s26, 0
      %s438 = sadd.s32 %s437, %s435
      %s439 = scalar_lea.vmem %s6, %s438
      %p440 = pneg %p248
      %p441 = pneg %p245
      %p442 = scmp.lt.s32.totalorder %s25, 1
      %s443 = scalar_select %p442, %s25, 1
      %s444 = scalar_lea.vmem %s7, %s443
      %p445 = pneg %p274
      %p446 = pneg %p271
      %p447 = scmp.lt.s32.totalorder %s25, 1
      %s448 = scalar_select %p447, %s25, 1
      %s449 = scalar_lea.vmem %s8, %s448
      %p450 = pneg %p300
      %p451 = pneg %p297
      %p452 = scmp.lt.s32.totalorder %s25, 1
      %s453 = scalar_select %p452, %s25, 1
      %s454 = scalar_lea.vmem %s9, %s453
      %p455 = scmp.lt.s32.totalorder %s25, 1
      %s456 = scalar_select %p455, %s25, 1
      %p457 = scmp.lt.s32.totalorder %s26, 0
      %s458 = scalar_select %p457, %s26, 0
      %s459 = sadd.s32 %s458, %s456
      %s460 = smul.addr %s459, 4
      %s461 = scalar_lea.vmem %s0, %s460
      %p462 = scmp.lt.s32.totalorder %s25, 1
      %s463 = scalar_select %p462, %s25, 1
      %p464 = scmp.lt.s32.totalorder %s26, 0
      %s465 = scalar_select %p464, %s26, 0
      %s466 = sadd.s32 %s465, %s463
      %s467 = scalar_lea.vmem %s1, %s466
      %p468 = scmp.lt.s32.totalorder %s25, 1
      %s469 = scalar_select %p468, %s25, 1
      %p470 = scmp.lt.s32.totalorder %s26, 0
      %s471 = scalar_select %p470, %s26, 0
      %s472 = sadd.s32 %s471, %s469
      %s473 = smul.addr %s472, 8
      %s474 = scalar_lea.vmem %s2, %s473
      %p475 = scmp.lt.s32.totalorder %s25, 1
      %s476 = scalar_select %p475, %s25, 1
      %p477 = scmp.lt.s32.totalorder %s26, 0
      %s478 = scalar_select %p477, %s26, 0
      %s479 = sadd.s32 %s478, %s476
      %s480 = smul.addr %s479, 8
      %s481 = scalar_lea.vmem %s3, %s480
      %p482 = scmp.lt.s32.totalorder %s25, 1
      %s483 = scalar_select %p482, %s25, 1
      %p484 = scmp.lt.s32.totalorder %s26, 0
      %s485 = scalar_select %p484, %s26, 0
      %s486 = sadd.s32 %s485, %s483
      %s487 = smul.addr %s486, 4
      %s488 = scalar_lea.vmem %s4, %s487
      %p489 = scmp.lt.s32.totalorder %s26, 0
      %s490 = scalar_select %p489, %s26, 0
      %s491 = smul.addr %s490, 4
      %s492 = scalar_lea.vmem %s5, %s491
      %p493 = scmp.lt.s32.totalorder %s25, 1
      %s494 = scalar_select %p493, %s25, 1
      %p495 = scmp.lt.s32.totalorder %s26, 0
      %s496 = scalar_select %p495, %s26, 0
      %s497 = sadd.s32 %s496, %s494
      %s498 = scalar_lea.vmem %s6, %s497
      %p499 = scmp.lt.s32.totalorder %s25, 1
      %s500 = scalar_select %p499, %s25, 1
      %s501 = scalar_lea.vmem %s7, %s500
      %p502 = scmp.lt.s32.totalorder %s25, 1
      %s503 = scalar_select %p502, %s25, 1
      %s504 = scalar_lea.vmem %s8, %s503
      %p505 = scmp.lt.s32.totalorder %s25, 1
      %s506 = scalar_select %p505, %s25, 1
      %s507 = scalar_lea.vmem %s9, %s506
      %v508 = vld [vmem:[%s461] sm:$0xf]
      %v509 = vld [vmem:[%s467] sm:$0x1]
      %v511 = vrot.slane %v508, 1
      %v513 = vmax.f32 %v508, %v511
      %v514 = vrot.slane %v508, 2
      %v516 = vmax.f32 %v513, %v514
      %v517 = vrot.slane %v508, 3
      %v519 = vmax.f32 %v516, %v517
      %v520 = vsub.f32 %v508, %v519
      %v521 = vmul.f32 %v520, 1.442695
      %v522 = vpow.pop %v521
      %v523 = vadd.f32 %v522, 0.0
      %vm524 = vcmp.eq.s32.totalorder %v509, 0
      %v525 = vsel %vm524, %v508, 0.0
      %v526 = vadd.f32 %v525, 0.0
      %v528 = vrot.slane %v519, 7
      %v530 = vsub.f32 %v508, %v528
      %v531 = vmul.f32 %v530, 1.442695
      %v532 = vpow.pop %v531
      %v534 = vrot.slane %v532, 1
      %v536 = vadd.f32 %v523, %v534
      %vm537 = vcmp.eq.s32.totalorder %v509, 1
      %v539 = vunpack.c.l.s4 1966171168
      %v540 = vunpack.c.0.s8 %v539
      %v541 = vlaneseq
      %v542 = vshrl.u32 %v541, 7
      %v543 = vsub.s32 %v540, %v542
      %v544 = vrot.slane %v508, %v543
      %v545 = vcombine.high %v544, %v544
      %v547 = vunpack.c.l.s4 1966171168
      %v548 = vunpack.c.0.s8 %v547
      %v549 = vlaneseq
      %v550 = vshrl.u32 %v549, 7
      %v551 = vsub.s32 %v548, %v550
      %v552 = vrot.slane %v544, %v551
      %v554 = vunpack.c.l.s4 1966171168
      %v555 = vunpack.c.0.s8 %v554
      %v556 = vlaneseq
      %v557 = vshrl.u32 %v556, 7
      %v558 = vsub.s32 %v555, %v557
      %v559 = vrot.slane %v545, %v558
      %v561 = vsel %vm537, %v559, 0.0
      %v562 = vadd.f32 %v526, %v561
      %v563 = vrot.slane %v519, 6
      %v565 = vsub.f32 %v508, %v563
      %v566 = vmul.f32 %v565, 1.442695
      %v567 = vpow.pop %v566
      %v569 = vrot.slane %v567, 2
      %v571 = vadd.f32 %v536, %v569
      %vm572 = vcmp.eq.s32.totalorder %v509, 2
      %v573 = vcombine.high %v552, %v552
      %v575 = vsel %vm572, %v573, 0.0
      %v576 = vadd.f32 %v562, %v575
      %v577 = vrot.slane %v519, 5
      %v579 = vsub.f32 %v508, %v577
      %v580 = vmul.f32 %v579, 1.442695
      %v581 = vpow.pop %v580
      %v583 = vrot.slane %v581, 3
      %v585 = vadd.f32 %v571, %v583
      %vm586 = vcmp.eq.s32.totalorder %v509, 3
      %v587 = vcombine.high %v559, %v559
      %v589 = vsel %vm586, %v587, 0.0
      %v590 = vadd.f32 %v576, %v589
      %v591 = vlog2.pop %v585
      %v592 = vmul.f32 %v591, 0.6931472
      %v593 = vadd.f32 %v592, %v519
      %v594 = vsub.f32 %v593, %v590
      %vm595 = vcmp.gt.s32.totalorder %v509, 0
      %v596 = vsel %vm595, 1, 0
      %v597 = vcvt.s32.f32 %v596
      %v598 = vlaneseq
      %v599 = vand.u32 %v598, 127
      %s600 = smul.u32 %s26, 128
      %v601 = vstv %s600
      %v602 = vadd.s32 %v599, %v601
      %v603 = vsel %vm595, 0.0, %v594
      %vm604 = vcmp.lt.s32.totalorder %v602, 128
      %v605 = vsel %vm604, %v603, -1e+30
      %606 = vst [vmem:[%s498] sm:$0x1] %v605
      %p607 = scmp.eq.s32.totalorder %s26, 0
      // Predicated region
      $region45: #{multibox_loss_forward.1} parent=43 // pred_check
        %p608 = pneg %p607
      $region46: #{multibox_loss_forward.1} parent=43 // pred_check_branch
        %610 = sbr.rel (%p608) target = $region48
      $region47: #{multibox_loss_forward.1} parent=43 // pred_region
        %611 = vst [vmem:[%s501] sm:$0x1] 0.0
        %612 = vst [vmem:[%s504] sm:$0x1] 0.0
        %613 = vst [vmem:[%s507] sm:$0x1] 0.0
      $region48: #{multibox_loss_forward.1} parent=43 // pred_fallthru
        _
      %v614 = vld [vmem:[%s501] sm:$0x1]
      %v615 = vmul.f32 %v594, %v597
      %vm616 = vcmask 1040384
      %v617 = vsel %vm616, %v615, 0.0
      %618 = vadd.xlane.f32.xlu0 %v617
      %v619 = vpop.xlane.xlu0 %618
      %v620 = vrot.slane %v619, 4
      %v621 = vadd.f32 %v619, %v620
      %v622 = vrot.slane %v621, 2
      %v623 = vadd.f32 %v621, %v622
      %v624 = vrot.slane %v623, 1
      %v625 = vadd.f32 %v623, %v624
      %s626 = vtos %v625
      %v627 = vstv %s626
      %v628 = vadd.f32 %v614, %v627
      %629 = vst [vmem:[%s501] sm:$0x1] %v628
      %v630 = vld [vmem:[%s474] sm:$0xff]
      %v631 = vld [vmem:[%s481] sm:$0xff]
      %v632 = vsub.f32 %v630, %v631
      %v633 = vand.u32 2147483647, %v632
      %vm634 = vcmp.lt.f32.partialorder %v633, 1.0
      %v635 = vmul.f32 %v632, 0.5
      %v636 = vmul.f32 %v635, %v632
      %v637 = vsub.f32 %v633, 0.5
      %v638 = vsel %vm634, %v636, %v637
      %v640 = vlaneseq
      %v641 = vshrl.u32 %v640, 7
      %v642 = vsub.s32 0, %v641
      %v643 = vrot.slane %v597, %v642
      %v645 = vmul.f32 %v638, %v643
      %646 = vadd.xlane.f32.xlu0 %v645
      %v647 = vpop.xlane.xlu0 %646
      %v648 = vrot.slane %v647, 4
      %v649 = vadd.f32 %v647, %v648
      %v650 = vrot.slane %v649, 2
      %v651 = vadd.f32 %v649, %v650
      %v652 = vrot.slane %v651, 1
      %v653 = vadd.f32 %v651, %v652
      %s654 = vtos %v653
      %v655 = vld [vmem:[%s504] sm:$0x1]
      %v656 = vstv %s654
      %v657 = vadd.f32 %v655, %v656
      %658 = vst [vmem:[%s504] sm:$0x1] %v657
      %v659 = vld [vmem:[%s492] sm:$0xf]
      %v660 = vmul.f32 %v659, 0.1
      %v661 = vld [vmem:[%s488] sm:$0xf]
      %v663 = vrot.slane %v660, 2
      %v665 = vmul.f32 %v630, %v663
      %v666 = vadd.f32 %v659, %v665
      %v667 = vmul.f32 %v630, %v660
      %v669 = vrot.slane %v667, 2
      %v671 = vadd.f32 %v659, %v669
      %v672 = vrot.slane %v660, 6
      %v674 = vmul.f32 %v630, %v672
      %v676 = vrot.slane %v674, 4
      %v678 = vadd.f32 %v659, %v676
      %v679 = vrot.slane %v660, 4
      %v681 = vmul.f32 %v630, %v679
      %v683 = vrot.slane %v681, 6
      %v685 = vadd.f32 %v659, %v683
      %v686 = vmin.f32 %v666, %v685
      %v687 = vsub.f32 %v686, %v661
      %v688 = vmul.f32 %v687, 10.0
      %v689 = vand.u32 2147483647, %v688
      %vm690 = vcmp.lt.f32.partialorder %v689, 1.0
      %v691 = vmul.f32 %v688, 0.5
      %v692 = vmul.f32 %v691, %v688
      %v693 = vsub.f32 %v689, 0.5
      %v694 = vsel %vm690, %v692, %v693
      %v695 = vmin.f32 %v666, %v671
      %v696 = vsub.f32 %v695, %v661
      %v697 = vmul.f32 %v696, 10.0
      %v698 = vand.u32 2147483647, %v697
      %vm699 = vcmp.lt.f32.partialorder %v698, 1.0
      %v700 = vmul.f32 %v697, 0.5
      %v701 = vmul.f32 %v700, %v697
      %v702 = vsub.f32 %v698, 0.5
      %v703 = vsel %vm699, %v701, %v702
      %v705 = vrot.slane %v703, 1
      %v707 = vadd.f32 %v694, %v705
      %v708 = vmax.f32 %v671, %v678
      %v710 = vrot.slane %v661, 2
      %v712 = vsub.f32 %v708, %v710
      %v713 = vmul.f32 %v712, 10.0
      %v714 = vand.u32 2147483647, %v713
      %vm715 = vcmp.lt.f32.partialorder %v714, 1.0
      %v716 = vmul.f32 %v713, 0.5
      %v717 = vmul.f32 %v716, %v713
      %v718 = vsub.f32 %v714, 0.5
      %v719 = vsel %vm715, %v717, %v718
      %v720 = vadd.f32 %v707, %v719
      %v721 = vmax.f32 %v678, %v685
      %v722 = vsub.f32 %v721, %v710
      %v723 = vmul.f32 %v722, 10.0
      %v724 = vand.u32 2147483647, %v723
      %vm725 = vcmp.lt.f32.partialorder %v724, 1.0
      %v726 = vmul.f32 %v723, 0.5
      %v727 = vmul.f32 %v726, %v723
      %v728 = vsub.f32 %v724, 0.5
      %v729 = vsel %vm725, %v727, %v728
      %v731 = vrot.slane %v729, 1
      %v733 = vadd.f32 %v720, %v731
      %v734 = vmul.f32 %v733, %v597
      %v735 = vsel %vm616, %v734, 0.0
      %736 = vadd.xlane.f32.xlu0 %v735
      %v737 = vpop.xlane.xlu0 %736
      %v738 = vrot.slane %v737, 4
      %v739 = vadd.f32 %v737, %v738
      %v740 = vrot.slane %v739, 2
      %v741 = vadd.f32 %v739, %v740
      %v742 = vrot.slane %v741, 1
      %v743 = vadd.f32 %v741, %v742
      %s744 = vtos %v743
      %v745 = vld [vmem:[%s507] sm:$0x1]
      %v746 = vstv %s744
      %v747 = vadd.f32 %v745, %v746
      %748 = vst [vmem:[%s507] sm:$0x1] %v747
      %p749 = scmp.lt.s32.totalorder %s25, 1
      %s750 = scalar_select %p749, %s25, 1
      %p751 = scmp.lt.s32.totalorder %s26, 0
      %s752 = scalar_select %p751, %s26, 0
      %s753 = sadd.s32 %s752, %s750
      %s754 = scalar_lea.vmem %s6, %s753
      %p755 = scmp.lt.s32.totalorder %s25, 1
      %s756 = scalar_select %p755, %s25, 1
      %s757 = scalar_lea.vmem %s7, %s756
      %p758 = scmp.lt.s32.totalorder %s25, 1
      %s759 = scalar_select %p758, %s25, 1
      %s760 = scalar_lea.vmem %s8, %s759
      %p761 = scmp.lt.s32.totalorder %s25, 1
      %s762 = scalar_select %p761, %s25, 1
      %s763 = scalar_lea.vmem %s9, %s762
      // Predicated region
      $region49: #{multibox_loss_forward.1} parent=43 // pred_check
        %p764 = pneg %p219
      $region50: #{multibox_loss_forward.1} parent=43 // pred_check_branch
        %766 = sbr.rel (%p764) target = $region52
      $region51: #{multibox_loss_forward.1} parent=43 // pred_region
        _
      $region52: #{multibox_loss_forward.1} parent=43 // pred_fallthru
        _
      // Predicated region
      $region53: #{multibox_loss_forward.1} parent=43 // pred_check
        %p767 = pneg %p245
      $region54: #{multibox_loss_forward.1} parent=43 // pred_check_branch
        %769 = sbr.rel (%p767) target = $region56
      $region55: #{multibox_loss_forward.1} parent=43 // pred_region
        _
      $region56: #{multibox_loss_forward.1} parent=43 // pred_fallthru
        _
      // Predicated region
      $region57: #{multibox_loss_forward.1} parent=43 // pred_check
        %p770 = pneg %p271
      $region58: #{multibox_loss_forward.1} parent=43 // pred_check_branch
        %772 = sbr.rel (%p770) target = $region60
      $region59: #{multibox_loss_forward.1} parent=43 // pred_region
        _
      $region60: #{multibox_loss_forward.1} parent=43 // pred_fallthru
        _
      // Predicated region
      $region61: #{multibox_loss_forward.1} parent=43 // pred_check
        %p773 = pneg %p297
      $region62: #{multibox_loss_forward.1} parent=43 // pred_check_branch
        %775 = sbr.rel (%p773) target = $region64
      $region63: #{multibox_loss_forward.1} parent=43 // pred_region
        _
      $region64: #{multibox_loss_forward.1} parent=43 // pred_fallthru
        _
    $region44: #{multibox_loss_forward.1} parent=5 // pred_fallthru
      _
    %p776 = scmp.le.s32.totalorder 2, %s16
    // Predicated region
    $region65: #{multibox_loss_forward.1} parent=5 // pred_check
      %p777 = pneg %p776
    $region66: #{multibox_loss_forward.1} parent=5 // pred_check_branch
      %779 = sbr.rel (%p777) target = $region68
    $region67: #{multibox_loss_forward.1} parent=5 // pred_region
      %s780 = ssub.s32 %s16, 2
      // Predicated region
      $region69: #{multibox_loss_forward.1} parent=67 // pred_check
        %p781 = pneg %p225
      $region70: #{multibox_loss_forward.1} parent=67 // pred_check_branch
        %783 = sbr.rel (%p781) target = $region72
      $region71: #{multibox_loss_forward.1} parent=67 // pred_region
        %p784 = scmp.lt.s32.totalorder %s27, 1
        %s785 = scalar_select %p784, %s27, 1
        %p786 = scmp.lt.s32.totalorder %s28, 0
        %s787 = scalar_select %p786, %s28, 0
        %s788 = sadd.s32 %s787, %s785
        %s789 = scalar_lea.vmem %s6, %s788
      $region72: #{multibox_loss_forward.1} parent=67 // pred_fallthru
        _
      // Predicated region
      $region73: #{multibox_loss_forward.1} parent=67 // pred_check
        %p790 = pneg %p251
      $region74: #{multibox_loss_forward.1} parent=67 // pred_check_branch
        %792 = sbr.rel (%p790) target = $region76
      $region75: #{multibox_loss_forward.1} parent=67 // pred_region
        %p793 = scmp.lt.s32.totalorder %s27, 1
        %s794 = scalar_select %p793, %s27, 1
        %s795 = scalar_lea.vmem %s7, %s794
      $region76: #{multibox_loss_forward.1} parent=67 // pred_fallthru
        _
      // Predicated region
      $region77: #{multibox_loss_forward.1} parent=67 // pred_check
        %p796 = pneg %p277
      $region78: #{multibox_loss_forward.1} parent=67 // pred_check_branch
        %798 = sbr.rel (%p796) target = $region80
      $region79: #{multibox_loss_forward.1} parent=67 // pred_region
        %p799 = scmp.lt.s32.totalorder %s27, 1
        %s800 = scalar_select %p799, %s27, 1
        %s801 = scalar_lea.vmem %s8, %s800
      $region80: #{multibox_loss_forward.1} parent=67 // pred_fallthru
        _
      // Predicated region
      $region81: #{multibox_loss_forward.1} parent=67 // pred_check
        %p802 = pneg %p303
      $region82: #{multibox_loss_forward.1} parent=67 // pred_check_branch
        %804 = sbr.rel (%p802) target = $region84
      $region83: #{multibox_loss_forward.1} parent=67 // pred_region
        %p805 = scmp.lt.s32.totalorder %s27, 1
        %s806 = scalar_select %p805, %s27, 1
        %s807 = scalar_lea.vmem %s9, %s806
      $region84: #{multibox_loss_forward.1} parent=67 // pred_fallthru
        _
    $region68: #{multibox_loss_forward.1} parent=5 // pred_fallthru
      _
  $region6: #{multibox_loss_forward.1} parent=0 // loop_footer
    %s20 = sadd.s32 1, %s16
  $region7: #{multibox_loss_forward.1} parent=0 // loop_footer_branch
    %15 = sbr.rel target = $region3
  $region8: #{multibox_loss_forward.1} parent=0 // loop_exit
    _

</llo_original>
